<compile_context>
chip_gen: v7x
topology: tpu7x:2x2x1
jax: 0.10.0
libtpu: 0.0.40
codegen_flags: <defaults>
</compile_context>

<pallas_src>
import jax
import jax.numpy as jnp
from jax.experimental import pallas as pl
from jax.experimental.pallas import tpu as pltpu


def _mlp_mul_kernel(x_ref, w_ref, b_ref, o_ref):
    """Fused affine + sigmoid on one (tile_m, nx) batch tile.

    x_ref : (tile_m, nx)  f32 activations (HBM-streamed, unpadded)
    w_ref : (nx, ny)      precomposed weight (compute dtype: f32 or bf16)
    b_ref : (1,  ny)      precomposed bias (f32)
    o_ref : (tile_m, ny)  f32 output tile
    """
    x = x_ref[...].astype(w_ref.dtype)     # VMEM-only cast; HBM traffic stays f32/unpadded
    # Single MXU matmul with f32 accumulation; bias-add stays f32 (v5e-safe epilogue).
    h = jnp.dot(x, w_ref[...], preferred_element_type=jnp.float32) + b_ref[...]
    # sigmoid(h) = 1 / (1 + exp(-h)); exp and approx reciprocal both land on the EUP.
    o_ref[...] = pl.reciprocal(1.0 + jnp.exp(-h), approx=True).astype(o_ref.dtype)


def _choose_tile_m(batch, *, tile_m_max=1024, min_steps=2):
    """Largest row tile (<= tile_m_max, multiple of 16) keeping >= min_steps grid steps."""
    if batch <= 16 * min_steps:
        return 16
    target = -(-batch // min_steps)                    # cdiv(batch, min_steps)
    target = ((target + 15) // 16) * 16                # round up to 16 (f32 & bf16 sublanes)
    return max(16, min(tile_m_max, target))


def mlp_mul_forward(x, packed, *, tile_m=None, compute_dtype=jnp.bfloat16):
    """Run the fused MLP kernel.

    x       : [batch, nx] float32
    packed  : dict from init_params(); precomposed weight/bias
    returns : [batch, ny] float32 (same semantics as MlpMulModel.forward)
    """
    batch, nx = x.shape
    assert nx == packed["nx"]
    ny = packed["ny"]

    w_eff = packed["w_eff_bf16"] if compute_dtype == jnp.bfloat16 else packed["w_eff_f32"]
    b_eff = packed["b_eff"]                              # biases stay f32

    if tile_m is None:
        tile_m = _choose_tile_m(batch)
    tile_m = max(16, min(tile_m, ((batch + 15) // 16) * 16))
    bp = -(-batch // tile_m) * tile_m                    # batch padded to tile multiple

    # Only the batch dimension is ever padded (nx-wide rows -> cheap); no lane padding.
    xp = x if bp == batch else jnp.pad(x, ((0, bp - batch), (0, 0)))

    out = pl.pallas_call(
        _mlp_mul_kernel,
        out_shape=jax.ShapeDtypeStruct((bp, ny), jnp.float32),
        grid=(bp // tile_m,),
        in_specs=[
            pl.BlockSpec((tile_m, nx), lambda i: (i, 0)),   # x: streamed per batch tile, unpadded
            pl.BlockSpec((nx, ny), lambda i: (0, 0)),       # W_eff: one DMA, VMEM-resident
            pl.BlockSpec((1, ny), lambda i: (0, 0)),        # b_eff: one DMA, VMEM-resident
        ],
        out_specs=pl.BlockSpec((tile_m, ny), lambda i: (i, 0)),  # ny-wide output, no lane pad
        compiler_params=pltpu.CompilerParams(
            dimension_semantics=("parallel",),   # batch tiles shard across TCs on v7x
        ),
    )(xp, w_eff, b_eff)

    return out if bp == batch else out[:batch]


def init_params(key, nx, hidden_size, ny):
    """PyTorch-style nn.Linear init; also precomposes the activation-free chain.

    nn.Linear(i, o): weight (o, i), bias (o,), both U(-1/sqrt(i), 1/sqrt(i)).
    We store weights pre-transposed as (i, o).
    """
    dims = [(nx, hidden_size),
            (hidden_size, hidden_size),
            (hidden_size, hidden_size),
            (hidden_size, ny)]
    raw = {}
    for idx, (fan_in, fan_out) in enumerate(dims):
        key, kw, kb = jax.random.split(key, 3)
        bound = 1.0 / float(fan_in) ** 0.5
        raw[f"w{idx + 1}"] = jax.random.uniform(kw, (fan_in, fan_out), jnp.float32, -bound, bound)
        raw[f"b{idx + 1}"] = jax.random.uniform(kb, (1, fan_out), jnp.float32, -bound, bound)

    # No nonlinearity between the 4 Linear layers -> collapse them into one affine map.
    w_eff = raw["w1"] @ raw["w2"] @ raw["w3"] @ raw["w4"]
    b_eff = ((raw["b1"] @ raw["w2"] + raw["b2"]) @ raw["w3"] + raw["b3"]) @ raw["w4"] + raw["b4"]

    packed = {
        "w_eff_f32": w_eff,
        "w_eff_bf16": w_eff.astype(jnp.bfloat16),   # pre-cast once; no per-call convert op
        "b_eff": b_eff,
        "nx": nx,
        "ny": ny,
    }
    return raw, packed


def reference_forward(x, raw):
    """Pure-JAX reference of MlpMulModel.forward (f32, un-fused 4-layer chain)."""
    h = x @ raw["w1"] + raw["b1"]
    h = h @ raw["w2"] + raw["b2"]
    h = h @ raw["w3"] + raw["b3"]
    h = h @ raw["w4"] + raw["b4"]
    return jax.nn.sigmoid(h)


if __name__ == "__main__":
    # Module-consistent small shapes: config['hidden_size']=32, nx=16, ny=8.
    # batch=512 exercises the batched "parallel" grid path (2 tiles of 256).
    batch, nx, hidden_size, ny = 512, 16, 32, 8

    key = jax.random.PRNGKey(0)
    key, kx = jax.random.split(key)
    x = jax.random.normal(kx, (batch, nx), dtype=jnp.float32)

    raw, packed = init_params(key, nx, hidden_size, ny)
    ref = reference_forward(x, raw)

    # f32 matmul path (exact module semantics up to rounding order / approx reciprocal).
    out_f32 = jax.block_until_ready(
        mlp_mul_forward(x, packed, compute_dtype=jnp.float32))
    assert out_f32.shape == (batch, ny)
    assert jnp.allclose(out_f32, ref, atol=2e-3, rtol=2e-3), "f32 Pallas output mismatch"

    # bf16 MXU path (default; recommended on v5e/v6e/v7x). f32 accumulate + epilogue.
    out_bf16 = jax.block_until_ready(
        mlp_mul_forward(x, packed, compute_dtype=jnp.bfloat16))
    assert out_bf16.shape == (batch, ny)
    assert jnp.allclose(out_bf16, ref, atol=3e-2, rtol=3e-2), "bf16 Pallas output mismatch"

    print("KERNEL_OK")
</pallas_src>

<mosaic_0001>
module attributes {stable_mosaic.version = 11 : i64} {
  func.func @_mlp_mul_kernel(%arg0: i32, %arg1: memref<256x16xf32, #tpu.memory_space<vmem>>, %arg2: memref<16x8xf32, #tpu.memory_space<vmem>>, %arg3: memref<1x8xf32, #tpu.memory_space<vmem>>, %arg4: memref<256x8xf32, #tpu.memory_space<vmem>>) attributes {dimension_semantics = [#tpu.dimension_semantics<parallel>], iteration_bounds = array<i64: 2>, scalar_prefetch = 0 : i64, scratch_operands = 0 : i64, tpu.core_type = #tpu.core_type<tc>, window_params = [{transform_indices = @transform_0, window_bounds = array<i64: 256, 16>}, {pipeline_mode = #tpu.pipeline_mode<synchronous>, transform_indices = @transform_1, window_bounds = array<i64: 16, 8>}, {pipeline_mode = #tpu.pipeline_mode<synchronous>, transform_indices = @transform_2, window_bounds = array<i64: 1, 8>}, {transform_indices = @transform_3, window_bounds = array<i64: 256, 8>}]} {
    %c0 = arith.constant 0 : index
    %c0_0 = arith.constant 0 : index
    %0 = vector.load %arg1[%c0, %c0_0] : memref<256x16xf32, #tpu.memory_space<vmem>>, vector<256x16xf32>
    %c0_1 = arith.constant 0 : index
    %c0_2 = arith.constant 0 : index
    %1 = vector.load %arg2[%c0_1, %c0_2] : memref<16x8xf32, #tpu.memory_space<vmem>>, vector<16x8xf32>
    %cst = arith.constant dense<0.000000e+00> : vector<256x8xf32>
    %2 = tpu.matmul %0, %1, %cst {dimension_numbers = #tpu.dot_dimension_numbers<[1], [0], [0], [1], [0, 0, 1, 1], [], []>} : vector<256x16xf32>, vector<16x8xf32>, vector<256x8xf32> -> vector<256x8xf32>
    %c0_3 = arith.constant 0 : index
    %c0_4 = arith.constant 0 : index
    %3 = vector.load %arg3[%c0_3, %c0_4] : memref<1x8xf32, #tpu.memory_space<vmem>>, vector<1x8xf32>
    %4 = vector.broadcast %3 : vector<1x8xf32> to vector<256x8xf32>
    %5 = arith.addf %2, %4 : vector<256x8xf32>
    %cst_5 = arith.constant 0.000000e+00 : f32
    %6 = vector.broadcast %cst_5 : f32 to vector<256x8xf32>
    %7 = arith.subf %6, %5 : vector<256x8xf32>
    %8 = math.exp %7 : vector<256x8xf32>
    %cst_6 = arith.constant 1.000000e+00 : f32
    %9 = vector.broadcast %cst_6 : f32 to vector<256x8xf32>
    %10 = arith.addf %9, %8 : vector<256x8xf32>
    %11 = tpu.reciprocal %10 {approx = true} : vector<256x8xf32> -> vector<256x8xf32>
    %c0_7 = arith.constant 0 : index
    %c0_8 = arith.constant 0 : index
    %12 = vector.load %arg4[%c0_7, %c0_8] : memref<256x8xf32, #tpu.memory_space<vmem>>, vector<256x8xf32>
    tpu.vector_store %arg4[%c0_7, %c0_8], %11 {strides = array<i32>} : memref<256x8xf32, #tpu.memory_space<vmem>>, vector<256x8xf32>,
    return
  }
  func.func @transform_0(%arg0: i32) -> (i32, i32) {
    %c0_i32 = arith.constant 0 : i32
    %c0_i32_0 = arith.constant 0 : i32
    return %arg0, %c0_i32 : i32, i32
  }
  func.func @transform_1(%arg0: i32) -> (i32, i32) {
    %c0_i32 = arith.constant 0 : i32
    %c0_i32_0 = arith.constant 0 : i32
    %c0_i32_1 = arith.constant 0 : i32
    return %c0_i32, %c0_i32_0 : i32, i32
  }
  func.func @transform_2(%arg0: i32) -> (i32, i32) {
    %c0_i32 = arith.constant 0 : i32
    %c0_i32_0 = arith.constant 0 : i32
    %c0_i32_1 = arith.constant 0 : i32
    return %c0_i32, %c0_i32_0 : i32, i32
  }
  func.func @transform_3(%arg0: i32) -> (i32, i32) {
    %c0_i32 = arith.constant 0 : i32
    %c0_i32_0 = arith.constant 0 : i32
    return %arg0, %c0_i32 : i32, i32
  }
}

</mosaic_0001>

<llo_original>
// kernel: tpu_custom_call.1
$region0: #{tpu_custom_call.1}
  #allocation0 [shape = 'u32[]', space=smem, size = 0x4, offset = 0x4, fixed_abs, tag = 'smem constant byte address 0x4 - core index']
  #allocation1 [shape = 'u32[144,128]{1,0:T(1,128)}', space=vmem, size = 0x12000, scoped, tag = 'internal scratch']
  %s0 = inlined_call_operand.vmem [shape: f32[512,16], index: 0, kind: input, shape index: {}]
  %s1 = inlined_call_operand.vmem [shape: f32[16,8], index: 1, kind: input, shape index: {}]
  %s2 = inlined_call_operand.vmem [shape: f32[1,8], index: 2, kind: input, shape index: {}]
  %s3 = inlined_call_operand.vmem [shape: f32[512,8], index: 3, kind: output, shape index: {}]
  %s4 = sld [smem:[#allocation0]]
  $region45: #{tpu_custom_call.1} parent=0
    _
  %s6 = ssub.s32 1, %s4
  %s7 = scalar_select 0, %s6, %s4
  loop: start=0, step=1, limit=4
  $region2: #{tpu_custom_call.1} parent=0 // loop_pre_header
    _
  $region3: #{tpu_custom_call.1} parent=0 // loop_header
    %s9 = sphi 0, %s13
    %p10 = scmp.ge.s32.totalorder %s9, 4
    %s19 = sphi 0, %s21
    %s22 = sphi 0, %s19
    %s23 = sphi 0, %s22
    %s39 = sphi 0, %s23
    %s43 = sphi 0, %s43
    %s45 = sphi 0, %s43
    %s46 = sphi 0, %s45
    %s60 = sphi 0, %s46
    %s64 = sphi 0, %s64
    %s66 = sphi 0, %s64
    %s67 = sphi 0, %s66
    %s81 = sphi 0, %s67
    %s87 = sphi 0, %s89
    %s90 = sphi 0, %s87
    %s91 = sphi 0, %s90
    %s107 = sphi 0, %s91
  $region4: #{tpu_custom_call.1} parent=0 // loop_header_branch
    %12 = sbr.rel (%p10) target = $region8
  $region5: #{tpu_custom_call.1} parent=0 // loop_body
    %s14 = ssub.s32 %s9, 1
    %s15 = ssub.s32 %s9, 2
    %s16 = sadd.s32 %s9, 1
    %s17 = ssub.s32 %s9, %s16
    %p18 = scmp.eq.s32.totalorder %s17, 0
    %s20 = sadd.s32 %s19, 1
    %s21 = scalar_select %p18, %s19, %s20
    %p24 = pneg %p18
    %p25 = scmp.eq.s32.totalorder %s9, 1
    %p26 = por %p24, %p25
    %p27 = scmp.ne.s32.totalorder %s19, %s22
    %p28 = scmp.eq.s32.totalorder %s9, 0
    %p29 = por %p27, %p28
    %p30 = scmp.ne.s32.totalorder %s19, %s22
    %p31 = scmp.eq.s32.totalorder %s14, 1
    %p32 = por %p30, %p31
    %p33 = scmp.ne.s32.totalorder %s22, %s23
    %p34 = scmp.eq.s32.totalorder %s14, 0
    %p35 = por %p33, %p34
    %p36 = scmp.ne.s32.totalorder %s22, %s23
    %p37 = scmp.eq.s32.totalorder %s15, 1
    %p38 = por %p36, %p37
    %p40 = scmp.ne.s32.totalorder %s23, %s39
    %p41 = scmp.eq.s32.totalorder %s15, 0
    %p42 = por %p40, %p41
    %s44 = sadd.s32 %s43, 1
    %p47 = scmp.eq.s32.totalorder %s9, 1
    %p48 = scmp.ne.s32.totalorder %s43, %s45
    %p49 = scmp.eq.s32.totalorder %s9, 0
    %p50 = por %p48, %p49
    %p51 = scmp.ne.s32.totalorder %s43, %s45
    %p52 = scmp.eq.s32.totalorder %s14, 1
    %p53 = por %p51, %p52
    %p54 = scmp.ne.s32.totalorder %s45, %s46
    %p55 = scmp.eq.s32.totalorder %s14, 0
    %p56 = por %p54, %p55
    %p57 = scmp.ne.s32.totalorder %s45, %s46
    %p58 = scmp.eq.s32.totalorder %s15, 1
    %p59 = por %p57, %p58
    %p61 = scmp.ne.s32.totalorder %s46, %s60
    %p62 = scmp.eq.s32.totalorder %s15, 0
    %p63 = por %p61, %p62
    %s65 = sadd.s32 %s64, 1
    %p68 = scmp.eq.s32.totalorder %s9, 1
    %p69 = scmp.ne.s32.totalorder %s64, %s66
    %p70 = scmp.eq.s32.totalorder %s9, 0
    %p71 = por %p69, %p70
    %p72 = scmp.ne.s32.totalorder %s64, %s66
    %p73 = scmp.eq.s32.totalorder %s14, 1
    %p74 = por %p72, %p73
    %p75 = scmp.ne.s32.totalorder %s66, %s67
    %p76 = scmp.eq.s32.totalorder %s14, 0
    %p77 = por %p75, %p76
    %p78 = scmp.ne.s32.totalorder %s66, %s67
    %p79 = scmp.eq.s32.totalorder %s15, 1
    %p80 = por %p78, %p79
    %p82 = scmp.ne.s32.totalorder %s67, %s81
    %p83 = scmp.eq.s32.totalorder %s15, 0
    %p84 = por %p82, %p83
    %s85 = ssub.s32 %s9, %s16
    %p86 = scmp.eq.s32.totalorder %s85, 0
    %s88 = sadd.s32 %s87, 1
    %s89 = scalar_select %p86, %s87, %s88
    %p92 = pneg %p86
    %p93 = scmp.eq.s32.totalorder %s9, 1
    %p94 = por %p92, %p93
    %p95 = scmp.ne.s32.totalorder %s87, %s90
    %p96 = scmp.eq.s32.totalorder %s9, 0
    %p97 = por %p95, %p96
    %p98 = scmp.ne.s32.totalorder %s87, %s90
    %p99 = scmp.eq.s32.totalorder %s14, 1
    %p100 = por %p98, %p99
    %p101 = scmp.ne.s32.totalorder %s90, %s91
    %p102 = scmp.eq.s32.totalorder %s14, 0
    %p103 = por %p101, %p102
    %p104 = scmp.ne.s32.totalorder %s90, %s91
    %p105 = scmp.eq.s32.totalorder %s15, 1
    %p106 = por %p104, %p105
    %p108 = scmp.ne.s32.totalorder %s91, %s107
    %p109 = scmp.eq.s32.totalorder %s15, 0
    %p110 = por %p108, %p109
    %p111 = scmp.le.s32.totalorder 1, %s9
    %p112 = scmp.lt.s32.totalorder %s9, 3
    %p113 = pnand %p111, %p112
    %p114 = pneg %p113
    // Predicated region
    $region9: #{tpu_custom_call.1} parent=5 // pred_check
      _
    $region10: #{tpu_custom_call.1} parent=5 // pred_check_branch
      %116 = sbr.rel (%p113) target = $region12
    $region11: #{tpu_custom_call.1} parent=5 // pred_region
      %s117 = ssub.s32 %s9, 1
      // Predicated region
      $region13: #{tpu_custom_call.1} parent=11 // pred_check
        %p118 = pneg %p56
      $region14: #{tpu_custom_call.1} parent=11 // pred_check_branch
        %120 = sbr.rel (%p118) target = $region16
      $region15: #{tpu_custom_call.1} parent=11 // pred_region
        _
      $region16: #{tpu_custom_call.1} parent=11 // pred_fallthru
        _
      // Predicated region
      $region17: #{tpu_custom_call.1} parent=11 // pred_check
        %p121 = pneg %p77
      $region18: #{tpu_custom_call.1} parent=11 // pred_check_branch
        %123 = sbr.rel (%p121) target = $region20
      $region19: #{tpu_custom_call.1} parent=11 // pred_region
        _
      $region20: #{tpu_custom_call.1} parent=11 // pred_fallthru
        _
    $region12: #{tpu_custom_call.1} parent=5 // pred_fallthru
      _
    %p124 = scmp.lt.s32.totalorder %s9, 2
    // Predicated region
    $region21: #{tpu_custom_call.1} parent=5 // pred_check
      %p125 = pneg %p124
    $region22: #{tpu_custom_call.1} parent=5 // pred_check_branch
      %127 = sbr.rel (%p125) target = $region24
    $region23: #{tpu_custom_call.1} parent=5 // pred_region
      // Predicated region
      $region25: #{tpu_custom_call.1} parent=23 // pred_check
        %p128 = pneg %p29
      $region26: #{tpu_custom_call.1} parent=23 // pred_check_branch
        %130 = sbr.rel (%p128) target = $region28
      $region27: #{tpu_custom_call.1} parent=23 // pred_region
        %s131 = smul.u32 32, %s9
        %p132 = scmp.lt.s32.totalorder %s131, 63
        %s133 = scalar_select %p132, %s131, 63
        %s134 = smul.addr %s133, 8
        %s135 = scalar_lea.vmem %s0, %s134
        %s136 = smul.u32 32, %s9
      $region28: #{tpu_custom_call.1} parent=23 // pred_fallthru
        _
    $region24: #{tpu_custom_call.1} parent=5 // pred_fallthru
      _
    %p137 = scmp.le.s32.totalorder 1, %s9
    %p138 = scmp.lt.s32.totalorder %s9, 3
    %p139 = pnand %p137, %p138
    %p140 = pneg %p139
    // Predicated region
    $region29: #{tpu_custom_call.1} parent=5 // pred_check
      _
    $region30: #{tpu_custom_call.1} parent=5 // pred_check_branch
      %142 = sbr.rel (%p139) target = $region32
    $region31: #{tpu_custom_call.1} parent=5 // pred_region
      %s143 = ssub.s32 %s9, 1
      %s144 = smul.u32 32, %s14
      %p145 = scmp.lt.s32.totalorder %s144, 63
      %s146 = scalar_select %p145, %s144, 63
      %s147 = smul.addr %s146, 8
      %s148 = scalar_lea.vmem %s0, %s147
      %p149 = pneg %p35
      %p150 = pneg %p32
      %p151 = pneg %p56
      %p152 = pneg %p53
      %p153 = pneg %p77
      %p154 = pneg %p74
      %p155 = pneg %p103
      %p156 = pneg %p100
      %s157 = smul.u32 32, %s14
      %p158 = scmp.lt.s32.totalorder %s157, 63
      %s159 = scalar_select %p158, %s157, 63
      %s160 = smul.addr %s159, 8
      %s161 = scalar_lea.vmem %s3, %s160
      %s162 = smul.u32 32, %s14
      %p163 = scmp.lt.s32.totalorder %s162, 63
      %s164 = scalar_select %p163, %s162, 63
      %s165 = smul.addr %s164, 8
      %s166 = scalar_lea.vmem %s0, %s165
      %s167 = smul.u32 32, %s14
      %s168 = smul.u32 32, %s14
      %p169 = scmp.lt.s32.totalorder %s168, 63
      %s170 = scalar_select %p169, %s168, 63
      %s171 = smul.addr %s170, 8
      %s172 = scalar_lea.vmem %s3, %s171
      %s173 = smul.u32 32, %s14
      %v174 = vld [vmem:[%s166] sm:$0xff]
      %v175 = vld [vmem:[%s166 + $0x8] sm:$0xff]
      %v176 = vld [vmem:[%s166 + $0x10] sm:$0xff]
      %v177 = vld [vmem:[%s166 + $0x18] sm:$0xff]
      %v178 = vld [vmem:[%s166 + $0x20] sm:$0xff]
      %v179 = vld [vmem:[%s166 + $0x28] sm:$0xff]
      %v180 = vld [vmem:[%s166 + $0x30] sm:$0xff]
      %v181 = vld [vmem:[%s166 + $0x38] sm:$0xff]
      %v182 = vld [vmem:[%s166 + $0x40] sm:$0xff]
      %v183 = vld [vmem:[%s166 + $0x48] sm:$0xff]
      %v184 = vld [vmem:[%s166 + $0x50] sm:$0xff]
      %v185 = vld [vmem:[%s166 + $0x58] sm:$0xff]
      %v186 = vld [vmem:[%s166 + $0x60] sm:$0xff]
      %v187 = vld [vmem:[%s166 + $0x68] sm:$0xff]
      %v188 = vld [vmem:[%s166 + $0x70] sm:$0xff]
      %v189 = vld [vmem:[%s166 + $0x78] sm:$0xff]
      %v190 = vld [vmem:[%s166 + $0x80] sm:$0xff]
      %v191 = vld [vmem:[%s166 + $0x88] sm:$0xff]
      %v192 = vld [vmem:[%s166 + $0x90] sm:$0xff]
      %v193 = vld [vmem:[%s166 + $0x98] sm:$0xff]
      %v194 = vld [vmem:[%s166 + $0xa0] sm:$0xff]
      %v195 = vld [vmem:[%s166 + $0xa8] sm:$0xff]
      %v196 = vld [vmem:[%s166 + $0xb0] sm:$0xff]
      %v197 = vld [vmem:[%s166 + $0xb8] sm:$0xff]
      %v198 = vld [vmem:[%s166 + $0xc0] sm:$0xff]
      %v199 = vld [vmem:[%s166 + $0xc8] sm:$0xff]
      %v200 = vld [vmem:[%s166 + $0xd0] sm:$0xff]
      %v201 = vld [vmem:[%s166 + $0xd8] sm:$0xff]
      %v202 = vld [vmem:[%s166 + $0xe0] sm:$0xff]
      %v203 = vld [vmem:[%s166 + $0xe8] sm:$0xff]
      %v204 = vld [vmem:[%s166 + $0xf0] sm:$0xff]
      %v205 = vld [vmem:[%s166 + $0xf8] sm:$0xff]
      %v206 = vld [vmem:[%s1] sm:$0xff]
      %v207 = vld [vmem:[%s1 + $0x8] sm:$0xff]
      %v208 = vld [vmem:[%s2] sm:$0x1]
      %v210 = vlaneseq
      %v211 = vshrl.u32 %v210, 7
      %v212 = vsub.s32 0, %v211
      %v213 = vrot.slane %v208, %v212
      %vm215 = vcmask 130048
      %v217 = vsel %vm215, %v174, 0
      %v220 = vsel %vm215, %v175, 0
      %v223 = vsel %vm215, %v176, 0
      %v226 = vsel %vm215, %v177, 0
      %v229 = vsel %vm215, %v178, 0
      %v232 = vsel %vm215, %v179, 0
      %v235 = vsel %vm215, %v180, 0
      %v238 = vsel %vm215, %v181, 0
      %v241 = vsel %vm215, %v182, 0
      %v244 = vsel %vm215, %v183, 0
      %v247 = vsel %vm215, %v184, 0
      %v250 = vsel %vm215, %v185, 0
      %v253 = vsel %vm215, %v186, 0
      %v256 = vsel %vm215, %v187, 0
      %v259 = vsel %vm215, %v188, 0
      %v262 = vsel %vm215, %v189, 0
      %v265 = vsel %vm215, %v190, 0
      %v268 = vsel %vm215, %v191, 0
      %v271 = vsel %vm215, %v192, 0
      %v274 = vsel %vm215, %v193, 0
      %v277 = vsel %vm215, %v194, 0
      %v280 = vsel %vm215, %v195, 0
      %v283 = vsel %vm215, %v196, 0
      %v286 = vsel %vm215, %v197, 0
      %v289 = vsel %vm215, %v198, 0
      %v292 = vsel %vm215, %v199, 0
      %v295 = vsel %vm215, %v200, 0
      %v298 = vsel %vm215, %v201, 0
      %v301 = vsel %vm215, %v202, 0
      %v304 = vsel %vm215, %v203, 0
      %v307 = vsel %vm215, %v204, 0
      %v310 = vsel %vm215, %v205, 0
      %312 = vmatprep.subr.mxu0 0.0
      %313 = vmatpush1.msra.mxu0 %v206
      %314 = vmatprep.subr.mxu0 0.0
      %315 = vmatpush1.msra.mxu0 %v207
      %316 = vmatprep.subr.mxu0 0.0
      %317 = vmatpush1.msra.mxu0 0.0
      %318 = vmatprep.subr.mxu0 0.0
      %319 = vmatpush1.msra.mxu0 0.0
      %320 = vmatprep.subr.mxu0 0.0
      %321 = vmatpush1.msra.mxu0 0.0
      %322 = vmatprep.subr.mxu0 0.0
      %323 = vmatpush1.msra.mxu0 0.0
      %324 = vmatprep.subr.mxu0 0.0
      %325 = vmatpush1.msra.mxu0 0.0
      %326 = vmatprep.subr.mxu0 0.0
      %327 = vmatpush1.msra.mxu0 0.0
      %328 = vmatprep.subr.mxu0 0.0
      %329 = vmatpush1.msra.mxu0 0.0
      %330 = vmatprep.subr.mxu0 0.0
      %331 = vmatpush1.msra.mxu0 0.0
      %332 = vmatprep.subr.mxu0 0.0
      %333 = vmatpush1.msra.mxu0 0.0
      %334 = vmatprep.subr.mxu0 0.0
      %335 = vmatpush1.msra.mxu0 0.0
      %336 = vmatprep.subr.mxu0 0.0
      %337 = vmatpush1.msra.mxu0 0.0
      %338 = vmatprep.subr.mxu0 0.0
      %339 = vmatpush1.msra.mxu0 0.0
      %340 = vmatprep.subr.mxu0 0.0
      %341 = vmatpush1.msra.mxu0 0.0
      %342 = vmatprep.subr.mxu0 0.0
      %343 = vmatpush1.msra.mxu0 0.0
      %344 = vmatprep.subr.mxu0 0.0
      %345 = vmatpush1.msra.mxu0 0.0
      %346 = vmatprep.subr.mxu0 0.0
      %347 = vmatpush1.msra.mxu0 0.0
      %348 = vmatprep.subr.mxu0 0.0
      %349 = vmatpush1.msra.mxu0 0.0
      %350 = vmatprep.subr.mxu0 0.0
      %351 = vmatpush1.msra.mxu0 0.0
      %352 = vmatprep.subr.mxu0 0.0
      %353 = vmatpush1.msra.mxu0 0.0
      %354 = vmatprep.subr.mxu0 0.0
      %355 = vmatpush1.msra.mxu0 0.0
      %356 = vmatprep.subr.mxu0 0.0
      %357 = vmatpush1.msra.mxu0 0.0
      %358 = vmatprep.subr.mxu0 0.0
      %359 = vmatpush1.msra.mxu0 0.0
      %360 = vmatprep.subr.mxu0 0.0
      %361 = vmatpush1.msra.mxu0 0.0
      %362 = vmatprep.subr.mxu0 0.0
      %363 = vmatpush1.msra.mxu0 0.0
      %364 = vmatprep.subr.mxu0 0.0
      %365 = vmatpush1.msra.mxu0 0.0
      %366 = vmatprep.subr.mxu0 0.0
      %367 = vmatpush1.msra.mxu0 0.0
      %368 = vmatprep.subr.mxu0 0.0
      %369 = vmatpush1.msra.mxu0 0.0
      %370 = vmatprep.subr.mxu0 0.0
      %371 = vmatpush1.msra.mxu0 0.0
      %372 = vmatprep.subr.mxu0 0.0
      %373 = vmatpush1.msra.mxu0 0.0
      %374 = vmatprep.subr.mxu0 0.0
      %375 = vmatpush1.msra.mxu0 0.0
      %376 = vmatprep.mubr.f32.mxu0 0.0
      %377 = vmatmul.mubr.f32.gmra.mrb[0].mxu0 %v217
      %v378 = vpop.f32.mrb[0].mxu0
      %v379 = vadd.f32 %v213, %v378
      %v380 = vpop.f32.mrb[0].mxu0
      %381 = vmatprep.mubr.f32.mxu0 0.0
      %382 = vmatmul.mubr.f32.gmra.mrb[0].mxu0 %v220
      %v383 = vpop.f32.mrb[0].mxu0
      %v384 = vadd.f32 %v213, %v383
      %v385 = vpop.f32.mrb[0].mxu0
      %386 = vmatprep.mubr.f32.mxu0 0.0
      %387 = vmatmul.mubr.f32.gmra.mrb[0].mxu0 %v223
      %v388 = vpop.f32.mrb[0].mxu0
      %v389 = vadd.f32 %v213, %v388
      %v390 = vpop.f32.mrb[0].mxu0
      %391 = vmatprep.mubr.f32.mxu0 0.0
      %392 = vmatmul.mubr.f32.gmra.mrb[0].mxu0 %v226
      %v393 = vpop.f32.mrb[0].mxu0
      %v394 = vadd.f32 %v213, %v393
      %v395 = vpop.f32.mrb[0].mxu0
      %396 = vmatprep.mubr.f32.mxu0 0.0
      %397 = vmatmul.mubr.f32.gmra.mrb[0].mxu0 %v229
      %v398 = vpop.f32.mrb[0].mxu0
      %v399 = vadd.f32 %v213, %v398
      %v400 = vpop.f32.mrb[0].mxu0
      %401 = vmatprep.mubr.f32.mxu0 0.0
      %402 = vmatmul.mubr.f32.gmra.mrb[0].mxu0 %v232
      %v403 = vpop.f32.mrb[0].mxu0
      %v404 = vadd.f32 %v213, %v403
      %v405 = vpop.f32.mrb[0].mxu0
      %406 = vmatprep.mubr.f32.mxu0 0.0
      %407 = vmatmul.mubr.f32.gmra.mrb[0].mxu0 %v235
      %v408 = vpop.f32.mrb[0].mxu0
      %v409 = vadd.f32 %v213, %v408
      %v410 = vpop.f32.mrb[0].mxu0
      %411 = vmatprep.mubr.f32.mxu0 0.0
      %412 = vmatmul.mubr.f32.gmra.mrb[0].mxu0 %v238
      %v413 = vpop.f32.mrb[0].mxu0
      %v414 = vadd.f32 %v213, %v413
      %v415 = vpop.f32.mrb[0].mxu0
      %416 = vmatprep.mubr.f32.mxu0 0.0
      %417 = vmatmul.mubr.f32.gmra.mrb[0].mxu0 %v241
      %v418 = vpop.f32.mrb[0].mxu0
      %v419 = vadd.f32 %v213, %v418
      %v420 = vpop.f32.mrb[0].mxu0
      %421 = vmatprep.mubr.f32.mxu0 0.0
      %422 = vmatmul.mubr.f32.gmra.mrb[0].mxu0 %v244
      %v423 = vpop.f32.mrb[0].mxu0
      %v424 = vadd.f32 %v213, %v423
      %v425 = vpop.f32.mrb[0].mxu0
      %426 = vmatprep.mubr.f32.mxu0 0.0
      %427 = vmatmul.mubr.f32.gmra.mrb[0].mxu0 %v247
      %v428 = vpop.f32.mrb[0].mxu0
      %v429 = vadd.f32 %v213, %v428
      %v430 = vpop.f32.mrb[0].mxu0
      %431 = vmatprep.mubr.f32.mxu0 0.0
      %432 = vmatmul.mubr.f32.gmra.mrb[0].mxu0 %v250
      %v433 = vpop.f32.mrb[0].mxu0
      %v434 = vadd.f32 %v213, %v433
      %v435 = vpop.f32.mrb[0].mxu0
      %436 = vmatprep.mubr.f32.mxu0 0.0
      %437 = vmatmul.mubr.f32.gmra.mrb[0].mxu0 %v253
      %v438 = vpop.f32.mrb[0].mxu0
      %v439 = vadd.f32 %v213, %v438
      %v440 = vpop.f32.mrb[0].mxu0
      %441 = vmatprep.mubr.f32.mxu0 0.0
      %442 = vmatmul.mubr.f32.gmra.mrb[0].mxu0 %v256
      %v443 = vpop.f32.mrb[0].mxu0
      %v444 = vadd.f32 %v213, %v443
      %v445 = vpop.f32.mrb[0].mxu0
      %446 = vmatprep.mubr.f32.mxu0 0.0
      %447 = vmatmul.mubr.f32.gmra.mrb[0].mxu0 %v259
      %v448 = vpop.f32.mrb[0].mxu0
      %v449 = vadd.f32 %v213, %v448
      %v450 = vpop.f32.mrb[0].mxu0
      %451 = vmatprep.mubr.f32.mxu0 0.0
      %452 = vmatmul.mubr.f32.gmra.mrb[0].mxu0 %v262
      %v453 = vpop.f32.mrb[0].mxu0
      %v454 = vadd.f32 %v213, %v453
      %v455 = vpop.f32.mrb[0].mxu0
      %456 = vmatprep.mubr.f32.mxu0 0.0
      %457 = vmatmul.mubr.f32.gmra.mrb[0].mxu0 %v265
      %v458 = vpop.f32.mrb[0].mxu0
      %v459 = vadd.f32 %v213, %v458
      %v460 = vpop.f32.mrb[0].mxu0
      %461 = vmatprep.mubr.f32.mxu0 0.0
      %462 = vmatmul.mubr.f32.gmra.mrb[0].mxu0 %v268
      %v463 = vpop.f32.mrb[0].mxu0
      %v464 = vadd.f32 %v213, %v463
      %v465 = vpop.f32.mrb[0].mxu0
      %466 = vmatprep.mubr.f32.mxu0 0.0
      %467 = vmatmul.mubr.f32.gmra.mrb[0].mxu0 %v271
      %v468 = vpop.f32.mrb[0].mxu0
      %v469 = vadd.f32 %v213, %v468
      %v470 = vpop.f32.mrb[0].mxu0
      %471 = vmatprep.mubr.f32.mxu0 0.0
      %472 = vmatmul.mubr.f32.gmra.mrb[0].mxu0 %v274
      %v473 = vpop.f32.mrb[0].mxu0
      %v474 = vadd.f32 %v213, %v473
      %v475 = vpop.f32.mrb[0].mxu0
      %476 = vmatprep.mubr.f32.mxu0 0.0
      %477 = vmatmul.mubr.f32.gmra.mrb[0].mxu0 %v277
      %v478 = vpop.f32.mrb[0].mxu0
      %v479 = vadd.f32 %v213, %v478
      %v480 = vpop.f32.mrb[0].mxu0
      %481 = vmatprep.mubr.f32.mxu0 0.0
      %482 = vmatmul.mubr.f32.gmra.mrb[0].mxu0 %v280
      %v483 = vpop.f32.mrb[0].mxu0
      %v484 = vadd.f32 %v213, %v483
      %v485 = vpop.f32.mrb[0].mxu0
      %486 = vmatprep.mubr.f32.mxu0 0.0
      %487 = vmatmul.mubr.f32.gmra.mrb[0].mxu0 %v283
      %v488 = vpop.f32.mrb[0].mxu0
      %v489 = vadd.f32 %v213, %v488
      %v490 = vpop.f32.mrb[0].mxu0
      %491 = vmatprep.mubr.f32.mxu0 0.0
      %492 = vmatmul.mubr.f32.gmra.mrb[0].mxu0 %v286
      %v493 = vpop.f32.mrb[0].mxu0
      %v494 = vadd.f32 %v213, %v493
      %v495 = vpop.f32.mrb[0].mxu0
      %496 = vmatprep.mubr.f32.mxu0 0.0
      %497 = vmatmul.mubr.f32.gmra.mrb[0].mxu0 %v289
      %v498 = vpop.f32.mrb[0].mxu0
      %v499 = vadd.f32 %v213, %v498
      %v500 = vpop.f32.mrb[0].mxu0
      %501 = vmatprep.mubr.f32.mxu0 0.0
      %502 = vmatmul.mubr.f32.gmra.mrb[0].mxu0 %v292
      %v503 = vpop.f32.mrb[0].mxu0
      %v504 = vadd.f32 %v213, %v503
      %v505 = vpop.f32.mrb[0].mxu0
      %506 = vmatprep.mubr.f32.mxu0 0.0
      %507 = vmatmul.mubr.f32.gmra.mrb[0].mxu0 %v295
      %v508 = vpop.f32.mrb[0].mxu0
      %v509 = vadd.f32 %v213, %v508
      %v510 = vpop.f32.mrb[0].mxu0
      %511 = vmatprep.mubr.f32.mxu0 0.0
      %512 = vmatmul.mubr.f32.gmra.mrb[0].mxu0 %v298
      %v513 = vpop.f32.mrb[0].mxu0
      %v514 = vadd.f32 %v213, %v513
      %v515 = vpop.f32.mrb[0].mxu0
      %516 = vmatprep.mubr.f32.mxu0 0.0
      %517 = vmatmul.mubr.f32.gmra.mrb[0].mxu0 %v301
      %v518 = vpop.f32.mrb[0].mxu0
      %v519 = vadd.f32 %v213, %v518
      %v520 = vpop.f32.mrb[0].mxu0
      %521 = vmatprep.mubr.f32.mxu0 0.0
      %522 = vmatmul.mubr.f32.gmra.mrb[0].mxu0 %v304
      %v523 = vpop.f32.mrb[0].mxu0
      %v524 = vadd.f32 %v213, %v523
      %v525 = vpop.f32.mrb[0].mxu0
      %526 = vmatprep.mubr.f32.mxu0 0.0
      %527 = vmatmul.mubr.f32.gmra.mrb[0].mxu0 %v307
      %v528 = vpop.f32.mrb[0].mxu0
      %v529 = vadd.f32 %v213, %v528
      %v530 = vpop.f32.mrb[0].mxu0
      %531 = vmatprep.mubr.f32.mxu0 0.0
      %532 = vmatmul.mubr.f32.gmra.mrb[0].mxu0 %v310
      %v533 = vpop.f32.mrb[0].mxu0
      %v534 = vadd.f32 %v213, %v533
      %v535 = vpop.f32.mrb[0].mxu0
      %536 = vdwg.mxu0
      %v537 = vsub.f32 0.0, %v379
      %v538 = vsub.f32 0.0, %v384
      %v539 = vsub.f32 0.0, %v389
      %v540 = vsub.f32 0.0, %v394
      %v541 = vsub.f32 0.0, %v399
      %v542 = vsub.f32 0.0, %v404
      %v543 = vsub.f32 0.0, %v409
      %v544 = vsub.f32 0.0, %v414
      %v545 = vsub.f32 0.0, %v419
      %v546 = vsub.f32 0.0, %v424
      %v547 = vsub.f32 0.0, %v429
      %v548 = vsub.f32 0.0, %v434
      %v549 = vsub.f32 0.0, %v439
      %v550 = vsub.f32 0.0, %v444
      %v551 = vsub.f32 0.0, %v449
      %v552 = vsub.f32 0.0, %v454
      %v553 = vsub.f32 0.0, %v459
      %v554 = vsub.f32 0.0, %v464
      %v555 = vsub.f32 0.0, %v469
      %v556 = vsub.f32 0.0, %v474
      %v557 = vsub.f32 0.0, %v479
      %v558 = vsub.f32 0.0, %v484
      %v559 = vsub.f32 0.0, %v489
      %v560 = vsub.f32 0.0, %v494
      %v561 = vsub.f32 0.0, %v499
      %v562 = vsub.f32 0.0, %v504
      %v563 = vsub.f32 0.0, %v509
      %v564 = vsub.f32 0.0, %v514
      %v565 = vsub.f32 0.0, %v519
      %v566 = vsub.f32 0.0, %v524
      %v567 = vsub.f32 0.0, %v529
      %v568 = vsub.f32 0.0, %v534
      %v569 = vmul.f32 %v537, 1.442695
      %v570 = vpow.pop %v569
      %v571 = vmul.f32 %v538, 1.442695
      %v572 = vpow.pop %v571
      %v573 = vmul.f32 %v539, 1.442695
      %v574 = vpow.pop %v573
      %v575 = vmul.f32 %v540, 1.442695
      %v576 = vpow.pop %v575
      %v577 = vmul.f32 %v541, 1.442695
      %v578 = vpow.pop %v577
      %v579 = vmul.f32 %v542, 1.442695
      %v580 = vpow.pop %v579
      %v581 = vmul.f32 %v543, 1.442695
      %v582 = vpow.pop %v581
      %v583 = vmul.f32 %v544, 1.442695
      %v584 = vpow.pop %v583
      %v585 = vmul.f32 %v545, 1.442695
      %v586 = vpow.pop %v585
      %v587 = vmul.f32 %v546, 1.442695
      %v588 = vpow.pop %v587
      %v589 = vmul.f32 %v547, 1.442695
      %v590 = vpow.pop %v589
      %v591 = vmul.f32 %v548, 1.442695
      %v592 = vpow.pop %v591
      %v593 = vmul.f32 %v549, 1.442695
      %v594 = vpow.pop %v593
      %v595 = vmul.f32 %v550, 1.442695
      %v596 = vpow.pop %v595
      %v597 = vmul.f32 %v551, 1.442695
      %v598 = vpow.pop %v597
      %v599 = vmul.f32 %v552, 1.442695
      %v600 = vpow.pop %v599
      %v601 = vmul.f32 %v553, 1.442695
      %v602 = vpow.pop %v601
      %v603 = vmul.f32 %v554, 1.442695
      %v604 = vpow.pop %v603
      %v605 = vmul.f32 %v555, 1.442695
      %v606 = vpow.pop %v605
      %v607 = vmul.f32 %v556, 1.442695
      %v608 = vpow.pop %v607
      %v609 = vmul.f32 %v557, 1.442695
      %v610 = vpow.pop %v609
      %v611 = vmul.f32 %v558, 1.442695
      %v612 = vpow.pop %v611
      %v613 = vmul.f32 %v559, 1.442695
      %v614 = vpow.pop %v613
      %v615 = vmul.f32 %v560, 1.442695
      %v616 = vpow.pop %v615
      %v617 = vmul.f32 %v561, 1.442695
      %v618 = vpow.pop %v617
      %v619 = vmul.f32 %v562, 1.442695
      %v620 = vpow.pop %v619
      %v621 = vmul.f32 %v563, 1.442695
      %v622 = vpow.pop %v621
      %v623 = vmul.f32 %v564, 1.442695
      %v624 = vpow.pop %v623
      %v625 = vmul.f32 %v565, 1.442695
      %v626 = vpow.pop %v625
      %v627 = vmul.f32 %v566, 1.442695
      %v628 = vpow.pop %v627
      %v629 = vmul.f32 %v567, 1.442695
      %v630 = vpow.pop %v629
      %v631 = vmul.f32 %v568, 1.442695
      %v632 = vpow.pop %v631
      %v633 = vadd.f32 %v570, 1.0
      %v634 = vadd.f32 %v572, 1.0
      %v635 = vadd.f32 %v574, 1.0
      %v636 = vadd.f32 %v576, 1.0
      %v637 = vadd.f32 %v578, 1.0
      %v638 = vadd.f32 %v580, 1.0
      %v639 = vadd.f32 %v582, 1.0
      %v640 = vadd.f32 %v584, 1.0
      %v641 = vadd.f32 %v586, 1.0
      %v642 = vadd.f32 %v588, 1.0
      %v643 = vadd.f32 %v590, 1.0
      %v644 = vadd.f32 %v592, 1.0
      %v645 = vadd.f32 %v594, 1.0
      %v646 = vadd.f32 %v596, 1.0
      %v647 = vadd.f32 %v598, 1.0
      %v648 = vadd.f32 %v600, 1.0
      %v649 = vadd.f32 %v602, 1.0
      %v650 = vadd.f32 %v604, 1.0
      %v651 = vadd.f32 %v606, 1.0
      %v652 = vadd.f32 %v608, 1.0
      %v653 = vadd.f32 %v610, 1.0
      %v654 = vadd.f32 %v612, 1.0
      %v655 = vadd.f32 %v614, 1.0
      %v656 = vadd.f32 %v616, 1.0
      %v657 = vadd.f32 %v618, 1.0
      %v658 = vadd.f32 %v620, 1.0
      %v659 = vadd.f32 %v622, 1.0
      %v660 = vadd.f32 %v624, 1.0
      %v661 = vadd.f32 %v626, 1.0
      %v662 = vadd.f32 %v628, 1.0
      %v663 = vadd.f32 %v630, 1.0
      %v664 = vadd.f32 %v632, 1.0
      %v665 = vrcp.pop %v633
      %v666 = vrcp.pop %v634
      %v667 = vrcp.pop %v635
      %v668 = vrcp.pop %v636
      %v669 = vrcp.pop %v637
      %v670 = vrcp.pop %v638
      %v671 = vrcp.pop %v639
      %v672 = vrcp.pop %v640
      %v673 = vrcp.pop %v641
      %v674 = vrcp.pop %v642
      %v675 = vrcp.pop %v643
      %v676 = vrcp.pop %v644
      %v677 = vrcp.pop %v645
      %v678 = vrcp.pop %v646
      %v679 = vrcp.pop %v647
      %v680 = vrcp.pop %v648
      %v681 = vrcp.pop %v649
      %v682 = vrcp.pop %v650
      %v683 = vrcp.pop %v651
      %v684 = vrcp.pop %v652
      %v685 = vrcp.pop %v653
      %v686 = vrcp.pop %v654
      %v687 = vrcp.pop %v655
      %v688 = vrcp.pop %v656
      %v689 = vrcp.pop %v657
      %v690 = vrcp.pop %v658
      %v691 = vrcp.pop %v659
      %v692 = vrcp.pop %v660
      %v693 = vrcp.pop %v661
      %v694 = vrcp.pop %v662
      %v695 = vrcp.pop %v663
      %v696 = vrcp.pop %v664
      %vm697 = vcmask 64512
      %698 = vst.msk [vmem:[%s172] sm:$0xff] %vm697, %v665
      %699 = vst.msk [vmem:[%s172 + $0x8] sm:$0xff] %vm697, %v666
      %700 = vst.msk [vmem:[%s172 + $0x10] sm:$0xff] %vm697, %v667
      %701 = vst.msk [vmem:[%s172 + $0x18] sm:$0xff] %vm697, %v668
      %702 = vst.msk [vmem:[%s172 + $0x20] sm:$0xff] %vm697, %v669
      %703 = vst.msk [vmem:[%s172 + $0x28] sm:$0xff] %vm697, %v670
      %704 = vst.msk [vmem:[%s172 + $0x30] sm:$0xff] %vm697, %v671
      %705 = vst.msk [vmem:[%s172 + $0x38] sm:$0xff] %vm697, %v672
      %706 = vst.msk [vmem:[%s172 + $0x40] sm:$0xff] %vm697, %v673
      %707 = vst.msk [vmem:[%s172 + $0x48] sm:$0xff] %vm697, %v674
      %708 = vst.msk [vmem:[%s172 + $0x50] sm:$0xff] %vm697, %v675
      %709 = vst.msk [vmem:[%s172 + $0x58] sm:$0xff] %vm697, %v676
      %710 = vst.msk [vmem:[%s172 + $0x60] sm:$0xff] %vm697, %v677
      %711 = vst.msk [vmem:[%s172 + $0x68] sm:$0xff] %vm697, %v678
      %712 = vst.msk [vmem:[%s172 + $0x70] sm:$0xff] %vm697, %v679
      %713 = vst.msk [vmem:[%s172 + $0x78] sm:$0xff] %vm697, %v680
      %714 = vst.msk [vmem:[%s172 + $0x80] sm:$0xff] %vm697, %v681
      %715 = vst.msk [vmem:[%s172 + $0x88] sm:$0xff] %vm697, %v682
      %716 = vst.msk [vmem:[%s172 + $0x90] sm:$0xff] %vm697, %v683
      %717 = vst.msk [vmem:[%s172 + $0x98] sm:$0xff] %vm697, %v684
      %718 = vst.msk [vmem:[%s172 + $0xa0] sm:$0xff] %vm697, %v685
      %719 = vst.msk [vmem:[%s172 + $0xa8] sm:$0xff] %vm697, %v686
      %720 = vst.msk [vmem:[%s172 + $0xb0] sm:$0xff] %vm697, %v687
      %721 = vst.msk [vmem:[%s172 + $0xb8] sm:$0xff] %vm697, %v688
      %722 = vst.msk [vmem:[%s172 + $0xc0] sm:$0xff] %vm697, %v689
      %723 = vst.msk [vmem:[%s172 + $0xc8] sm:$0xff] %vm697, %v690
      %724 = vst.msk [vmem:[%s172 + $0xd0] sm:$0xff] %vm697, %v691
      %725 = vst.msk [vmem:[%s172 + $0xd8] sm:$0xff] %vm697, %v692
      %726 = vst.msk [vmem:[%s172 + $0xe0] sm:$0xff] %vm697, %v693
      %727 = vst.msk [vmem:[%s172 + $0xe8] sm:$0xff] %vm697, %v694
      %728 = vst.msk [vmem:[%s172 + $0xf0] sm:$0xff] %vm697, %v695
      %729 = vst.msk [vmem:[%s172 + $0xf8] sm:$0xff] %vm697, %v696
      %s730 = smul.u32 32, %s14
      %p731 = scmp.lt.s32.totalorder %s730, 63
      %s732 = scalar_select %p731, %s730, 63
      %s733 = smul.addr %s732, 8
      %s734 = scalar_lea.vmem %s3, %s733
      // Predicated region
      $region33: #{tpu_custom_call.1} parent=31 // pred_check
        %p735 = pneg %p100
      $region34: #{tpu_custom_call.1} parent=31 // pred_check_branch
        %737 = sbr.rel (%p735) target = $region36
      $region35: #{tpu_custom_call.1} parent=31 // pred_region
        %s738 = smul.u32 32, %s14
      $region36: #{tpu_custom_call.1} parent=31 // pred_fallthru
        _
    $region32: #{tpu_custom_call.1} parent=5 // pred_fallthru
      _
    %p739 = scmp.le.s32.totalorder 2, %s9
    // Predicated region
    $region37: #{tpu_custom_call.1} parent=5 // pred_check
      %p740 = pneg %p739
    $region38: #{tpu_custom_call.1} parent=5 // pred_check_branch
      %742 = sbr.rel (%p740) target = $region40
    $region39: #{tpu_custom_call.1} parent=5 // pred_region
      %s743 = ssub.s32 %s9, 2
      // Predicated region
      $region41: #{tpu_custom_call.1} parent=39 // pred_check
        %p744 = pneg %p106
      $region42: #{tpu_custom_call.1} parent=39 // pred_check_branch
        %746 = sbr.rel (%p744) target = $region44
      $region43: #{tpu_custom_call.1} parent=39 // pred_region
        %s747 = smul.u32 32, %s15
        %p748 = scmp.lt.s32.totalorder %s747, 63
        %s749 = scalar_select %p748, %s747, 63
        %s750 = smul.addr %s749, 8
        %s751 = scalar_lea.vmem %s3, %s750
      $region44: #{tpu_custom_call.1} parent=39 // pred_fallthru
        _
    $region40: #{tpu_custom_call.1} parent=5 // pred_fallthru
      _
  $region6: #{tpu_custom_call.1} parent=0 // loop_footer
    %s13 = sadd.s32 1, %s9
  $region7: #{tpu_custom_call.1} parent=0 // loop_footer_branch
    %8 = sbr.rel target = $region3
  $region8: #{tpu_custom_call.1} parent=0 // loop_exit
    _

</llo_original>
